<compile_context>
chip_gen: v7x
topology: tpu7x:2x2x1
jax: 0.10.0
libtpu: 0.0.40
codegen_flags: <defaults>
</compile_context>

<pallas_src>
import math

import numpy as np
import jax
import jax.numpy as jnp
from jax import lax
from jax.experimental import pallas as pl
from jax.experimental.pallas import tpu as pltpu

_LANES = 128
_SUBLANES = 8


def _round_up(a, b):
    return ((a + b - 1) // b) * b


# ----------------------------------------------------------------------------
# Host glue: BFS spanning tree with per-source ascending-angle edge order.
# ----------------------------------------------------------------------------
def _build_spanning_tree_levels(src, dst, w_scalar, node_num, start_node):
    """BFS from start_node over edges sorted per source by ascending rotation angle.

    Sort key: angle = 2*acos(clip(w,-1,1)) deg is strictly decreasing in clip(w,-1,1),
    so -clip(w,-1,1) is an order-equivalent key (ties map to identical keys and the
    stable lexsort keeps the original edge order, matching the reference semantics).

    Returns children / edge ids / parent-local-index / child-local-index / child-level
    (all in BFS discovery order) plus per-level child counts (levels >= 1).
    """
    key = -np.clip(w_scalar, -1.0, 1.0)
    order = np.lexsort((key, src))                 # stable: primary src, secondary key
    src_sorted = src[order]
    node_ids = np.arange(node_num)
    starts = np.searchsorted(src_sorted, node_ids, side="left")
    ends = np.searchsorted(src_sorted, node_ids, side="right")

    visited = np.zeros(node_num, dtype=bool)
    visited[start_node] = True
    level_of = {start_node: 0}
    local_of = {start_node: 0}
    queue = [start_node]
    head = 0
    children, edge_ids, parent_local, child_local, child_level = [], [], [], [], []
    level_sizes = []
    while head < len(queue):
        u = queue[head]
        head += 1
        lu = level_of[u]
        for e_idx in order[starts[u]:ends[u]]:
            v = int(dst[e_idx])
            if not visited[v]:
                visited[v] = True
                lv = lu + 1
                if lv > len(level_sizes):
                    level_sizes.append(0)
                j = level_sizes[lv - 1]
                level_sizes[lv - 1] = j + 1
                level_of[v] = lv
                local_of[v] = j
                queue.append(v)
                children.append(v)
                edge_ids.append(int(e_idx))
                parent_local.append(local_of[u])
                child_local.append(j)
                child_level.append(lv)
    return children, edge_ids, parent_local, child_local, child_level, level_sizes


def _build_level_inputs(ea, children, edge_ids, parent_local, child_local,
                        child_level, level_sizes):
    """Builds lane-dense slabs for the level-parallel propagation kernel.

    Columns are grouped by BFS level, each level padded to a multiple of 128 lanes.
      sel : (w_max, c_total) one-hot parent-gather matrix; sel[p, c] = 1 iff the parent
            of the child in column c has local index p within the previous level.
            Used as a static MXU gather inside the kernel.
      rel : (8, c_total) pre-conjugated relative quaternions (w, -x, -y, -z) in rows
            0..3 at each child's column (inv_q of a unit quaternion = conjugate).
    """
    widths = [_LANES] + [_round_up(n, _LANES) for n in level_sizes]
    col_starts = [0]
    for w in widths:
        col_starts.append(col_starts[-1] + w)
    c_total = col_starts[-1]
    w_max = max(widths)

    sel = np.zeros((w_max, c_total), dtype=np.float32)
    rel = np.zeros((_SUBLANES, c_total), dtype=np.float32)
    child_cols = np.zeros(len(children), dtype=np.int32)
    for t in range(len(children)):
        col = col_starts[child_level[t]] + child_local[t]
        child_cols[t] = col
        sel[parent_local[t], col] = 1.0
        q = ea[edge_ids[t]]
        rel[0, col] = q[0]
        rel[1, col] = -q[1]
        rel[2, col] = -q[2]
        rel[3, col] = -q[3]
    return sel, rel, col_starts, child_cols


# ----------------------------------------------------------------------------
# Pallas kernel: level-parallel spanning-tree quaternion propagation (VMEM / VPU)
# ----------------------------------------------------------------------------
def _make_level_propagate_kernel(col_starts):
    """col_starts: python ints; level l occupies columns [col_starts[l], col_starts[l+1])."""
    n_levels = len(col_starts) - 2

    def kernel(sel_ref, rel_ref, quat_ref):
        quat_ref[...] = jnp.zeros_like(quat_ref)
        # Start node = identity quaternion at (row 0 = w, column 0).
        row = lax.broadcasted_iota(jnp.int32, (_SUBLANES, _LANES), 0)
        col = lax.broadcasted_iota(jnp.int32, (_SUBLANES, _LANES), 1)
        quat_ref[:, 0:_LANES] = ((row == 0) & (col == 0)).astype(jnp.float32)

        # One whole-vreg VPU step per BFS level: O(depth), not O(#children) scalar ops.
        for l in range(1, n_levels + 1):
            pcs, pce = col_starts[l - 1], col_starts[l]      # previous level columns
            cs, ce = col_starts[l], col_starts[l + 1]        # this level's columns
            prev_w = pce - pcs
            # Static one-hot gather of the parent quaternions on the MXU
            # (parents of level l live in level l-1; untouched columns are zero).
            parent = jnp.dot(quat_ref[:, pcs:pce], sel_ref[0:prev_w, cs:ce],
                             preferred_element_type=jnp.float32)      # (8, ce - cs)
            pw, px, py, pz = (parent[0:1, :], parent[1:2, :],
                              parent[2:3, :], parent[3:4, :])
            rw, rx, ry, rz = (rel_ref[0:1, cs:ce], rel_ref[1:2, cs:ce],
                              rel_ref[2:3, cs:ce], rel_ref[3:4, cs:ce])
            # Hamilton product qmul(rel_conj, parent) -- rel is pre-conjugated on host.
            ow = rw * pw - rx * px - ry * py - rz * pz
            ox = rw * px + rx * pw + ry * pz - rz * py
            oy = rw * py - rx * pz + ry * pw + rz * px
            oz = rw * pz + rx * py - ry * px + rz * pw
            zero = jnp.zeros_like(ow)
            quat_ref[:, cs:ce] = jnp.concatenate(
                [ow, ox, oy, oz, zero, zero, zero, zero], axis=0)

    return kernel


def spt_propagate_level_pallas(sel, rel, col_starts):
    """sel: (w_max, c_total) one-hot f32, rel: (8, c_total) f32.  Returns (8, c_total)
    slab whose rows 0..3 hold the propagated quaternion of each child column."""
    c_total = rel.shape[1]
    # TODO(synk): for very deep, narrow trees the one-hot SEL slab grows as
    #             depth * 128 * 128 floats; stream per-level SEL/REL blocks
    #             (emit_pipeline / scalar-prefetched indices) instead of holding
    #             everything VMEM-resident at once.
    # TODO(synk): on v7x the second TensorCore idles here; wide levels could be split
    #             across cores with a ("parallel",) grid axis over lane chunks.
    return pl.pallas_call(
        _make_level_propagate_kernel(col_starts),
        out_shape=jax.ShapeDtypeStruct((_SUBLANES, c_total), jnp.float32),
        in_specs=[pl.BlockSpec(memory_space=pltpu.MemorySpace.VMEM),
                  pl.BlockSpec(memory_space=pltpu.MemorySpace.VMEM)],
        out_specs=pl.BlockSpec(memory_space=pltpu.MemorySpace.VMEM),
    )(sel, rel)


# ----------------------------------------------------------------------------
# Forward pass (equivalent of QuaternionSPT.forward)
# ----------------------------------------------------------------------------
def quaternion_spt_forward(edge_attr, edge_index, gt_rot=None, gt_id=None, start_node=None):
    """Returns (start_node, node_quat[N, 4])."""
    ea = np.asarray(edge_attr, dtype=np.float32)
    ei = np.asarray(edge_index).astype(np.int64)

    node_num = int(ei.max()) + 1
    if gt_id is None:
        gt_id_np = np.ones(node_num, dtype=bool)
    else:
        gt_id_np = np.asarray(gt_id, dtype=bool)
    if start_node is None:
        # TODO(synk): reference picks a random ground-truth node via torch.randperm;
        #             here the first ground-truth node is chosen deterministically.
        start_node = int(np.arange(node_num)[gt_id_np][0])
    else:
        start_node = int(start_node)

    # Host glue: sorted-edge BFS spanning tree, grouped by BFS level.  Sort keys are
    # -clip(w,-1,1) (monotone equivalent of quaternion2deg), so no device kernel and
    # no mid-pipeline host<->device sync is needed for the angles.
    (children, edge_ids, parent_local, child_local, child_level,
     level_sizes) = _build_spanning_tree_levels(ei[0], ei[1], ea[:, 0], node_num, start_node)

    # Identity init for every node is a vectorized broadcast (no scalar init loop).
    node_quat = jnp.tile(jnp.array([[1.0, 0.0, 0.0, 0.0]], jnp.float32), (node_num, 1))

    if children:
        sel, rel, col_starts, child_cols = _build_level_inputs(
            ea, children, edge_ids, parent_local, child_local, child_level, level_sizes)
        quat_slab = spt_propagate_level_pallas(
            jnp.asarray(sel), jnp.asarray(rel), col_starts)
        child_quats = quat_slab[0:4, jnp.asarray(child_cols)].T          # (T, 4)
        # Children are unique (each node discovered once) -> well-defined scatter.
        node_quat = node_quat.at[jnp.asarray(children, dtype=jnp.int32)].set(child_quats)

    return start_node, node_quat


# ----------------------------------------------------------------------------
# Pure-numpy reference (original semantics: acos degrees + per-node stable sort)
# ----------------------------------------------------------------------------
def _np_qmul(a, b):
    w1, x1, y1, z1 = a
    w2, x2, y2, z2 = b
    return np.array(
        [w1 * w2 - x1 * x2 - y1 * y2 - z1 * z2,
         w1 * x2 + x1 * w2 + y1 * z2 - z1 * y2,
         w1 * y2 - x1 * z2 + y1 * w2 + z1 * x2,
         w1 * z2 + x1 * y2 - y1 * x2 + z1 * w2], dtype=np.float32)


def _np_reference(edge_attr, edge_index, start_node):
    ea = np.asarray(edge_attr).astype(np.float32)
    ei = np.asarray(edge_index).astype(np.int64)
    node_num = int(ei.max()) + 1
    deg = (2.0 * np.arccos(np.clip(ea[:, 0], -1.0, 1.0)) * 180.0 / math.pi).astype(np.float32)

    sorted_edges = {}
    for i in range(node_num):
        sel = np.nonzero(ei[0] == i)[0]
        sorted_edges[i] = sel[np.argsort(deg[sel], kind="stable")]

    visited = np.zeros(node_num, dtype=bool)
    visited[start_node] = True
    queue = [start_node]
    node_quat = np.zeros((node_num, 4), dtype=np.float32)
    node_quat[:, 0] = 1.0
    while queue:
        u = queue.pop(0)
        for e_idx in sorted_edges[u]:
            v = int(ei[1][e_idx])
            if not visited[v]:
                visited[v] = True
                queue.append(v)
                r = ea[e_idx]
                inv_r = np.array([r[0], -r[1], -r[2], -r[3]], dtype=np.float32)
                node_quat[v] = _np_qmul(inv_r, node_quat[u])
    return node_quat


# ----------------------------------------------------------------------------
if __name__ == "__main__":
    key = jax.random.PRNGKey(0)

    # Test 1: small deterministic graph -- 8 nodes, 10 undirected edges (20 directed).
    pairs = [(0, 1), (1, 2), (2, 3), (3, 4), (4, 5), (5, 6), (6, 7), (0, 3), (2, 5), (1, 6)]
    src = [u for (u, v) in pairs] + [v for (u, v) in pairs]
    dst = [v for (u, v) in pairs] + [u for (u, v) in pairs]
    edge_index = jnp.asarray(np.stack([src, dst], axis=0), jnp.int32)        # [2, E]
    key, sub = jax.random.split(key)
    q = jax.random.normal(sub, (edge_index.shape[1], 4), dtype=jnp.float32)
    edge_attr = q / jnp.linalg.norm(q, axis=1, keepdims=True)                # unit quats

    start_node, node_quat = quaternion_spt_forward(edge_attr, edge_index, start_node=0)
    node_quat = jax.block_until_ready(node_quat)
    ref = _np_reference(edge_attr, edge_index, start_node=0)
    np.testing.assert_allclose(np.asarray(node_quat), ref, rtol=1e-4, atol=1e-5)

    # Test 2: random graph (16 nodes, 40 directed edges) -> multi-child BFS levels.
    rng = np.random.default_rng(0)
    n_nodes, n_und = 16, 20
    und = rng.integers(0, n_nodes, size=(n_und, 2))
    und[:, 1] = (und[:, 0] + 1 + und[:, 1] % (n_nodes - 1)) % n_nodes        # no self loops
    src2 = np.concatenate([und[:, 0], und[:, 1]])
    dst2 = np.concatenate([und[:, 1], und[:, 0]])
    edge_index2 = jnp.asarray(np.stack([src2, dst2], axis=0), jnp.int32)
    key, sub = jax.random.split(key)
    q2 = jax.random.normal(sub, (edge_index2.shape[1], 4), dtype=jnp.float32)
    edge_attr2 = q2 / jnp.linalg.norm(q2, axis=1, keepdims=True)

    start2, node_quat2 = quaternion_spt_forward(edge_attr2, edge_index2, start_node=0)
    node_quat2 = jax.block_until_ready(node_quat2)
    ref2 = _np_reference(edge_attr2, edge_index2, start_node=0)
    np.testing.assert_allclose(np.asarray(node_quat2), ref2, rtol=1e-4, atol=1e-5)

    print("KERNEL_OK")
</pallas_src>

<mosaic_0001>
module attributes {stable_mosaic.version = 11 : i64} {
  func.func @kernel(%arg0: memref<128x512xf32, #tpu.memory_space<vmem>>, %arg1: memref<8x512xf32, #tpu.memory_space<vmem>>, %arg2: memref<8x512xf32, #tpu.memory_space<vmem>>) attributes {dimension_semantics = [], scalar_prefetch = 0 : i64, scratch_operands = 0 : i64, tpu.core_type = #tpu.core_type<tc>} {
    %cst = arith.constant 0.000000e+00 : f32
    %0 = vector.broadcast %cst : f32 to vector<8x512xf32>
    %c0 = arith.constant 0 : index
    %c0_0 = arith.constant 0 : index
    %1 = vector.load %arg2[%c0, %c0_0] : memref<8x512xf32, #tpu.memory_space<vmem>>, vector<8x512xf32>
    tpu.vector_store %arg2[%c0, %c0_0], %0 {strides = array<i32>} : memref<8x512xf32, #tpu.memory_space<vmem>>, vector<8x512xf32>,
    %2 = tpu.iota {dimensions = array<i32: 0>} : vector<8x128xi32>
    %3 = tpu.iota {dimensions = array<i32: 1>} : vector<8x128xi32>
    %c0_i32 = arith.constant 0 : i32
    %4 = vector.broadcast %c0_i32 : i32 to vector<8x128xi32>
    %5 = arith.cmpi eq, %2, %4 : vector<8x128xi32>
    %c0_i32_1 = arith.constant 0 : i32
    %6 = vector.broadcast %c0_i32_1 : i32 to vector<8x128xi32>
    %7 = arith.cmpi eq, %3, %6 : vector<8x128xi32>
    %8 = arith.andi %5, %7 : vector<8x128xi1>
    %9 = arith.extui %8 : vector<8x128xi1> to vector<8x128xi32>
    %10 = arith.sitofp %9 : vector<8x128xi32> to vector<8x128xf32>
    %c0_2 = arith.constant 0 : index
    %c0_3 = arith.constant 0 : index
    %11 = vector.load %arg2[%c0_2, %c0_3] : memref<8x512xf32, #tpu.memory_space<vmem>>, vector<8x128xf32>
    tpu.vector_store %arg2[%c0_2, %c0_3], %10 {strides = array<i32>} : memref<8x512xf32, #tpu.memory_space<vmem>>, vector<8x128xf32>,
    %c0_4 = arith.constant 0 : index
    %c0_5 = arith.constant 0 : index
    %12 = vector.load %arg2[%c0_4, %c0_5] : memref<8x512xf32, #tpu.memory_space<vmem>>, vector<8x128xf32>
    %c0_6 = arith.constant 0 : index
    %c128 = arith.constant 128 : index
    %13 = vector.load %arg0[%c0_6, %c128] : memref<128x512xf32, #tpu.memory_space<vmem>>, vector<128x128xf32>
    %cst_7 = arith.constant dense<0.000000e+00> : vector<8x128xf32>
    %14 = tpu.matmul %12, %13, %cst_7 {dimension_numbers = #tpu.dot_dimension_numbers<[1], [0], [0], [1], [0, 0, 1, 1], [], []>} : vector<8x128xf32>, vector<128x128xf32>, vector<8x128xf32> -> vector<8x128xf32>
    %15 = vector.extract_strided_slice %14 {offsets = [0, 0], sizes = [1, 128], strides = [1, 1]} : vector<8x128xf32> to vector<1x128xf32>
    %16 = vector.extract_strided_slice %14 {offsets = [1, 0], sizes = [1, 128], strides = [1, 1]} : vector<8x128xf32> to vector<1x128xf32>
    %17 = vector.extract_strided_slice %14 {offsets = [2, 0], sizes = [1, 128], strides = [1, 1]} : vector<8x128xf32> to vector<1x128xf32>
    %18 = vector.extract_strided_slice %14 {offsets = [3, 0], sizes = [1, 128], strides = [1, 1]} : vector<8x128xf32> to vector<1x128xf32>
    %c0_8 = arith.constant 0 : index
    %c128_9 = arith.constant 128 : index
    %19 = vector.load %arg1[%c0_8, %c128_9] : memref<8x512xf32, #tpu.memory_space<vmem>>, vector<1x128xf32>
    %c1 = arith.constant 1 : index
    %c128_10 = arith.constant 128 : index
    %20 = vector.load %arg1[%c1, %c128_10] : memref<8x512xf32, #tpu.memory_space<vmem>>, vector<1x128xf32>
    %c2 = arith.constant 2 : index
    %c128_11 = arith.constant 128 : index
    %21 = vector.load %arg1[%c2, %c128_11] : memref<8x512xf32, #tpu.memory_space<vmem>>, vector<1x128xf32>
    %c3 = arith.constant 3 : index
    %c128_12 = arith.constant 128 : index
    %22 = vector.load %arg1[%c3, %c128_12] : memref<8x512xf32, #tpu.memory_space<vmem>>, vector<1x128xf32>
    %23 = arith.mulf %19, %15 : vector<1x128xf32>
    %24 = arith.mulf %20, %16 : vector<1x128xf32>
    %25 = arith.subf %23, %24 : vector<1x128xf32>
    %26 = arith.mulf %21, %17 : vector<1x128xf32>
    %27 = arith.subf %25, %26 : vector<1x128xf32>
    %28 = arith.mulf %22, %18 : vector<1x128xf32>
    %29 = arith.subf %27, %28 : vector<1x128xf32>
    %30 = arith.mulf %19, %16 : vector<1x128xf32>
    %31 = arith.mulf %20, %15 : vector<1x128xf32>
    %32 = arith.addf %30, %31 : vector<1x128xf32>
    %33 = arith.mulf %21, %18 : vector<1x128xf32>
    %34 = arith.addf %32, %33 : vector<1x128xf32>
    %35 = arith.mulf %22, %17 : vector<1x128xf32>
    %36 = arith.subf %34, %35 : vector<1x128xf32>
    %37 = arith.mulf %19, %17 : vector<1x128xf32>
    %38 = arith.mulf %20, %18 : vector<1x128xf32>
    %39 = arith.subf %37, %38 : vector<1x128xf32>
    %40 = arith.mulf %21, %15 : vector<1x128xf32>
    %41 = arith.addf %39, %40 : vector<1x128xf32>
    %42 = arith.mulf %22, %16 : vector<1x128xf32>
    %43 = arith.addf %41, %42 : vector<1x128xf32>
    %44 = arith.mulf %19, %18 : vector<1x128xf32>
    %45 = arith.mulf %20, %17 : vector<1x128xf32>
    %46 = arith.addf %44, %45 : vector<1x128xf32>
    %47 = arith.mulf %21, %16 : vector<1x128xf32>
    %48 = arith.subf %46, %47 : vector<1x128xf32>
    %49 = arith.mulf %22, %15 : vector<1x128xf32>
    %50 = arith.addf %48, %49 : vector<1x128xf32>
    %cst_13 = arith.constant 0.000000e+00 : f32
    %51 = vector.broadcast %cst_13 : f32 to vector<1x128xf32>
    %52 = tpu.concatenate %29, %36, %43, %50, %51, %51, %51, %51 in 0 : vector<1x128xf32>, vector<1x128xf32>, vector<1x128xf32>, vector<1x128xf32>, vector<1x128xf32>, vector<1x128xf32>, vector<1x128xf32>, vector<1x128xf32> -> vector<8x128xf32>
    %c0_14 = arith.constant 0 : index
    %c128_15 = arith.constant 128 : index
    %53 = vector.load %arg2[%c0_14, %c128_15] : memref<8x512xf32, #tpu.memory_space<vmem>>, vector<8x128xf32>
    tpu.vector_store %arg2[%c0_14, %c128_15], %52 {strides = array<i32>} : memref<8x512xf32, #tpu.memory_space<vmem>>, vector<8x128xf32>,
    %c0_16 = arith.constant 0 : index
    %c128_17 = arith.constant 128 : index
    %54 = vector.load %arg2[%c0_16, %c128_17] : memref<8x512xf32, #tpu.memory_space<vmem>>, vector<8x128xf32>
    %c0_18 = arith.constant 0 : index
    %c256 = arith.constant 256 : index
    %55 = vector.load %arg0[%c0_18, %c256] : memref<128x512xf32, #tpu.memory_space<vmem>>, vector<128x128xf32>
    %cst_19 = arith.constant dense<0.000000e+00> : vector<8x128xf32>
    %56 = tpu.matmul %54, %55, %cst_19 {dimension_numbers = #tpu.dot_dimension_numbers<[1], [0], [0], [1], [0, 0, 1, 1], [], []>} : vector<8x128xf32>, vector<128x128xf32>, vector<8x128xf32> -> vector<8x128xf32>
    %57 = vector.extract_strided_slice %56 {offsets = [0, 0], sizes = [1, 128], strides = [1, 1]} : vector<8x128xf32> to vector<1x128xf32>
    %58 = vector.extract_strided_slice %56 {offsets = [1, 0], sizes = [1, 128], strides = [1, 1]} : vector<8x128xf32> to vector<1x128xf32>
    %59 = vector.extract_strided_slice %56 {offsets = [2, 0], sizes = [1, 128], strides = [1, 1]} : vector<8x128xf32> to vector<1x128xf32>
    %60 = vector.extract_strided_slice %56 {offsets = [3, 0], sizes = [1, 128], strides = [1, 1]} : vector<8x128xf32> to vector<1x128xf32>
    %c0_20 = arith.constant 0 : index
    %c256_21 = arith.constant 256 : index
    %61 = vector.load %arg1[%c0_20, %c256_21] : memref<8x512xf32, #tpu.memory_space<vmem>>, vector<1x128xf32>
    %c1_22 = arith.constant 1 : index
    %c256_23 = arith.constant 256 : index
    %62 = vector.load %arg1[%c1_22, %c256_23] : memref<8x512xf32, #tpu.memory_space<vmem>>, vector<1x128xf32>
    %c2_24 = arith.constant 2 : index
    %c256_25 = arith.constant 256 : index
    %63 = vector.load %arg1[%c2_24, %c256_25] : memref<8x512xf32, #tpu.memory_space<vmem>>, vector<1x128xf32>
    %c3_26 = arith.constant 3 : index
    %c256_27 = arith.constant 256 : index
    %64 = vector.load %arg1[%c3_26, %c256_27] : memref<8x512xf32, #tpu.memory_space<vmem>>, vector<1x128xf32>
    %65 = arith.mulf %61, %57 : vector<1x128xf32>
    %66 = arith.mulf %62, %58 : vector<1x128xf32>
    %67 = arith.subf %65, %66 : vector<1x128xf32>
    %68 = arith.mulf %63, %59 : vector<1x128xf32>
    %69 = arith.subf %67, %68 : vector<1x128xf32>
    %70 = arith.mulf %64, %60 : vector<1x128xf32>
    %71 = arith.subf %69, %70 : vector<1x128xf32>
    %72 = arith.mulf %61, %58 : vector<1x128xf32>
    %73 = arith.mulf %62, %57 : vector<1x128xf32>
    %74 = arith.addf %72, %73 : vector<1x128xf32>
    %75 = arith.mulf %63, %60 : vector<1x128xf32>
    %76 = arith.addf %74, %75 : vector<1x128xf32>
    %77 = arith.mulf %64, %59 : vector<1x128xf32>
    %78 = arith.subf %76, %77 : vector<1x128xf32>
    %79 = arith.mulf %61, %59 : vector<1x128xf32>
    %80 = arith.mulf %62, %60 : vector<1x128xf32>
    %81 = arith.subf %79, %80 : vector<1x128xf32>
    %82 = arith.mulf %63, %57 : vector<1x128xf32>
    %83 = arith.addf %81, %82 : vector<1x128xf32>
    %84 = arith.mulf %64, %58 : vector<1x128xf32>
    %85 = arith.addf %83, %84 : vector<1x128xf32>
    %86 = arith.mulf %61, %60 : vector<1x128xf32>
    %87 = arith.mulf %62, %59 : vector<1x128xf32>
    %88 = arith.addf %86, %87 : vector<1x128xf32>
    %89 = arith.mulf %63, %58 : vector<1x128xf32>
    %90 = arith.subf %88, %89 : vector<1x128xf32>
    %91 = arith.mulf %64, %57 : vector<1x128xf32>
    %92 = arith.addf %90, %91 : vector<1x128xf32>
    %cst_28 = arith.constant 0.000000e+00 : f32
    %93 = vector.broadcast %cst_28 : f32 to vector<1x128xf32>
    %94 = tpu.concatenate %71, %78, %85, %92, %93, %93, %93, %93 in 0 : vector<1x128xf32>, vector<1x128xf32>, vector<1x128xf32>, vector<1x128xf32>, vector<1x128xf32>, vector<1x128xf32>, vector<1x128xf32>, vector<1x128xf32> -> vector<8x128xf32>
    %c0_29 = arith.constant 0 : index
    %c256_30 = arith.constant 256 : index
    %95 = vector.load %arg2[%c0_29, %c256_30] : memref<8x512xf32, #tpu.memory_space<vmem>>, vector<8x128xf32>
    tpu.vector_store %arg2[%c0_29, %c256_30], %94 {strides = array<i32>} : memref<8x512xf32, #tpu.memory_space<vmem>>, vector<8x128xf32>,
    %c0_31 = arith.constant 0 : index
    %c256_32 = arith.constant 256 : index
    %96 = vector.load %arg2[%c0_31, %c256_32] : memref<8x512xf32, #tpu.memory_space<vmem>>, vector<8x128xf32>
    %c0_33 = arith.constant 0 : index
    %c384 = arith.constant 384 : index
    %97 = vector.load %arg0[%c0_33, %c384] : memref<128x512xf32, #tpu.memory_space<vmem>>, vector<128x128xf32>
    %cst_34 = arith.constant dense<0.000000e+00> : vector<8x128xf32>
    %98 = tpu.matmul %96, %97, %cst_34 {dimension_numbers = #tpu.dot_dimension_numbers<[1], [0], [0], [1], [0, 0, 1, 1], [], []>} : vector<8x128xf32>, vector<128x128xf32>, vector<8x128xf32> -> vector<8x128xf32>
    %99 = vector.extract_strided_slice %98 {offsets = [0, 0], sizes = [1, 128], strides = [1, 1]} : vector<8x128xf32> to vector<1x128xf32>
    %100 = vector.extract_strided_slice %98 {offsets = [1, 0], sizes = [1, 128], strides = [1, 1]} : vector<8x128xf32> to vector<1x128xf32>
    %101 = vector.extract_strided_slice %98 {offsets = [2, 0], sizes = [1, 128], strides = [1, 1]} : vector<8x128xf32> to vector<1x128xf32>
    %102 = vector.extract_strided_slice %98 {offsets = [3, 0], sizes = [1, 128], strides = [1, 1]} : vector<8x128xf32> to vector<1x128xf32>
    %c0_35 = arith.constant 0 : index
    %c384_36 = arith.constant 384 : index
    %103 = vector.load %arg1[%c0_35, %c384_36] : memref<8x512xf32, #tpu.memory_space<vmem>>, vector<1x128xf32>
    %c1_37 = arith.constant 1 : index
    %c384_38 = arith.constant 384 : index
    %104 = vector.load %arg1[%c1_37, %c384_38] : memref<8x512xf32, #tpu.memory_space<vmem>>, vector<1x128xf32>
    %c2_39 = arith.constant 2 : index
    %c384_40 = arith.constant 384 : index
    %105 = vector.load %arg1[%c2_39, %c384_40] : memref<8x512xf32, #tpu.memory_space<vmem>>, vector<1x128xf32>
    %c3_41 = arith.constant 3 : index
    %c384_42 = arith.constant 384 : index
    %106 = vector.load %arg1[%c3_41, %c384_42] : memref<8x512xf32, #tpu.memory_space<vmem>>, vector<1x128xf32>
    %107 = arith.mulf %103, %99 : vector<1x128xf32>
    %108 = arith.mulf %104, %100 : vector<1x128xf32>
    %109 = arith.subf %107, %108 : vector<1x128xf32>
    %110 = arith.mulf %105, %101 : vector<1x128xf32>
    %111 = arith.subf %109, %110 : vector<1x128xf32>
    %112 = arith.mulf %106, %102 : vector<1x128xf32>
    %113 = arith.subf %111, %112 : vector<1x128xf32>
    %114 = arith.mulf %103, %100 : vector<1x128xf32>
    %115 = arith.mulf %104, %99 : vector<1x128xf32>
    %116 = arith.addf %114, %115 : vector<1x128xf32>
    %117 = arith.mulf %105, %102 : vector<1x128xf32>
    %118 = arith.addf %116, %117 : vector<1x128xf32>
    %119 = arith.mulf %106, %101 : vector<1x128xf32>
    %120 = arith.subf %118, %119 : vector<1x128xf32>
    %121 = arith.mulf %103, %101 : vector<1x128xf32>
    %122 = arith.mulf %104, %102 : vector<1x128xf32>
    %123 = arith.subf %121, %122 : vector<1x128xf32>
    %124 = arith.mulf %105, %99 : vector<1x128xf32>
    %125 = arith.addf %123, %124 : vector<1x128xf32>
    %126 = arith.mulf %106, %100 : vector<1x128xf32>
    %127 = arith.addf %125, %126 : vector<1x128xf32>
    %128 = arith.mulf %103, %102 : vector<1x128xf32>
    %129 = arith.mulf %104, %101 : vector<1x128xf32>
    %130 = arith.addf %128, %129 : vector<1x128xf32>
    %131 = arith.mulf %105, %100 : vector<1x128xf32>
    %132 = arith.subf %130, %131 : vector<1x128xf32>
    %133 = arith.mulf %106, %99 : vector<1x128xf32>
    %134 = arith.addf %132, %133 : vector<1x128xf32>
    %cst_43 = arith.constant 0.000000e+00 : f32
    %135 = vector.broadcast %cst_43 : f32 to vector<1x128xf32>
    %136 = tpu.concatenate %113, %120, %127, %134, %135, %135, %135, %135 in 0 : vector<1x128xf32>, vector<1x128xf32>, vector<1x128xf32>, vector<1x128xf32>, vector<1x128xf32>, vector<1x128xf32>, vector<1x128xf32>, vector<1x128xf32> -> vector<8x128xf32>
    %c0_44 = arith.constant 0 : index
    %c384_45 = arith.constant 384 : index
    %137 = vector.load %arg2[%c0_44, %c384_45] : memref<8x512xf32, #tpu.memory_space<vmem>>, vector<8x128xf32>
    tpu.vector_store %arg2[%c0_44, %c384_45], %136 {strides = array<i32>} : memref<8x512xf32, #tpu.memory_space<vmem>>, vector<8x128xf32>,
    return
  }
}

</mosaic_0001>

<llo_original>
// kernel: tpu_custom_call.1
$region0: #{tpu_custom_call.1}
  #allocation0 [shape = 'u32[]', space=smem, size = 0x4, offset = 0x4, fixed_abs, tag = 'smem constant byte address 0x4 - core index']
  #allocation1 [shape = 'u32[144,128]{1,0:T(1,128)}', space=vmem, size = 0x12000, scoped, tag = 'internal scratch']
  %s0 = inlined_call_operand.hbm [shape: f32[128,512], index: 0, kind: input, shape index: {}]
  %s1 = inlined_call_operand.hbm [shape: f32[8,512], index: 1, kind: input, shape index: {}]
  %s2 = inlined_call_operand.hbm [shape: f32[8,512], index: 2, kind: output, shape index: {}]
  %s3 = sld [smem:[#allocation0]]
  $region26: #{tpu_custom_call.1} parent=0
    _
  %s5 = ssub.s32 1, %s3
  %s6 = scalar_select 0, %s5, %s3
  $region1: #{tpu_custom_call.1} parent=0
    #allocation2 [shape = 'u8[262144]{0}', space=vmem, size = 0x40000, scoped, tag = 'input window, operand 0, single buffered']
    #allocation3 [shape = 's32[1]{0}', space=sflag, size = 0x4, scoped, tag = 'scoped memory for tpu_custom_call.1']
    #allocation4 [shape = 's32[1]{0}', space=sflag, size = 0x4, scoped, tag = 'scoped memory for tpu_custom_call.1']
    #allocation5 [shape = 'u8[16384]{0}', space=vmem, size = 0x4000, scoped, tag = 'input window, operand 1, single buffered']
    #allocation6 [shape = 's32[1]{0}', space=sflag, size = 0x4, scoped, tag = 'scoped memory for tpu_custom_call.1']
    #allocation7 [shape = 'u8[16384]{0}', space=vmem, size = 0x4000, scoped, tag = 'output window, operand 0, single buffered']
    %7 = vsyncpa [#allocation3], 0
    %8 = vsyncpa [#allocation6], 0
    %9 = vsyncpa [#allocation4], 0
    // Predicated region
    $region2: #{tpu_custom_call.1} parent=1 // pred_check
      _
    $region3: #{tpu_custom_call.1} parent=1 // pred_check_branch
      %11 = sbr.rel (0) target = $region5
    $region4: #{tpu_custom_call.1} parent=1 // pred_region
      %s13 = ssub.s32 8192, 8192
      %14 = vsyncadd [#allocation3], %s13
      %s15 = sshll.u32 [#allocation2], 4
      %s16 = int_to_ptr.vmem [resolvable:$true] %s15
      %21 = dma.hbm_to_vmem [thread:$0]  %s0, 8192, %s16, [#allocation3], 512, 512, 32
    $region5: #{tpu_custom_call.1} parent=1 // pred_fallthru
      _
    // Predicated region
    $region6: #{tpu_custom_call.1} parent=1 // pred_check
      _
    $region7: #{tpu_custom_call.1} parent=1 // pred_check_branch
      %23 = sbr.rel (0) target = $region9
    $region8: #{tpu_custom_call.1} parent=1 // pred_region
      %s25 = ssub.s32 512, 512
      %26 = vsyncadd [#allocation6], %s25
      %s28 = sshll.u32 [#allocation5], 4
      %s29 = int_to_ptr.vmem [resolvable:$true] %s28
      %31 = dma.hbm_to_vmem [thread:$0]  %s1, 512, %s29, [#allocation6]
    $region9: #{tpu_custom_call.1} parent=1 // pred_fallthru
      _
    // Predicated region
    $region10: #{tpu_custom_call.1} parent=1 // pred_check
      _
    $region11: #{tpu_custom_call.1} parent=1 // pred_check_branch
      %33 = sbr.rel (0) target = $region13
    $region12: #{tpu_custom_call.1} parent=1 // pred_region
      %34 = dma.done [#allocation3], 8192
    $region13: #{tpu_custom_call.1} parent=1 // pred_fallthru
      _
    // Predicated region
    $region14: #{tpu_custom_call.1} parent=1 // pred_check
      _
    $region15: #{tpu_custom_call.1} parent=1 // pred_check_branch
      %36 = sbr.rel (0) target = $region17
    $region16: #{tpu_custom_call.1} parent=1 // pred_region
      %37 = dma.done [#allocation6], 512
    $region17: #{tpu_custom_call.1} parent=1 // pred_fallthru
      _
    %38 = vst [vmem:[#allocation7] sm:$0xff] 0.0
    %39 = vst [vmem:[#allocation7 + $0x8] sm:$0xff] 0.0
    %40 = vst [vmem:[#allocation7 + $0x10] sm:$0xff] 0.0
    %41 = vst [vmem:[#allocation7 + $0x18] sm:$0xff] 0.0
    %v42 = vlaneseq
    %v43 = vshrl.u32 %v42, 7
    %v44 = vlaneseq
    %v45 = vand.u32 %v44, 127
    %vm46 = vcmp.eq.s32.totalorder %v43, 0
    %vm47 = vcmp.eq.s32.totalorder %v45, 0
    %vm48 = vmand %vm46, %vm47
    %v49 = vsel %vm48, 1, 0
    %v50 = vcvt.s32.f32 %v49
    %51 = vst [vmem:[#allocation7] sm:$0xff] %v50
    %v52 = vld [vmem:[#allocation7] sm:$0xff]
    %v53 = vld [vmem:[#allocation2 + $0x8] sm:$0xff]
    %v54 = vld [vmem:[#allocation2 + $0x28] sm:$0xff]
    %v55 = vld [vmem:[#allocation2 + $0x48] sm:$0xff]
    %v56 = vld [vmem:[#allocation2 + $0x68] sm:$0xff]
    %v57 = vld [vmem:[#allocation2 + $0x88] sm:$0xff]
    %v58 = vld [vmem:[#allocation2 + $0xa8] sm:$0xff]
    %v59 = vld [vmem:[#allocation2 + $0xc8] sm:$0xff]
    %v60 = vld [vmem:[#allocation2 + $0xe8] sm:$0xff]
    %v61 = vld [vmem:[#allocation2 + $0x108] sm:$0xff]
    %v62 = vld [vmem:[#allocation2 + $0x128] sm:$0xff]
    %v63 = vld [vmem:[#allocation2 + $0x148] sm:$0xff]
    %v64 = vld [vmem:[#allocation2 + $0x168] sm:$0xff]
    %v65 = vld [vmem:[#allocation2 + $0x188] sm:$0xff]
    %v66 = vld [vmem:[#allocation2 + $0x1a8] sm:$0xff]
    %v67 = vld [vmem:[#allocation2 + $0x1c8] sm:$0xff]
    %v68 = vld [vmem:[#allocation2 + $0x1e8] sm:$0xff]
    %69 = vmatprep.subr.mxu0 0.0
    %70 = vmatpush1.msra.mxu0 %v53
    %71 = vmatprep.subr.mxu0 0.0
    %72 = vmatpush1.msra.mxu0 %v54
    %73 = vmatprep.subr.mxu0 0.0
    %74 = vmatpush1.msra.mxu0 %v55
    %75 = vmatprep.subr.mxu0 0.0
    %76 = vmatpush1.msra.mxu0 %v56
    %77 = vmatprep.subr.mxu0 0.0
    %78 = vmatpush1.msra.mxu0 %v57
    %79 = vmatprep.subr.mxu0 0.0
    %80 = vmatpush1.msra.mxu0 %v58
    %81 = vmatprep.subr.mxu0 0.0
    %82 = vmatpush1.msra.mxu0 %v59
    %83 = vmatprep.subr.mxu0 0.0
    %84 = vmatpush1.msra.mxu0 %v60
    %85 = vmatprep.subr.mxu0 0.0
    %86 = vmatpush1.msra.mxu0 %v61
    %87 = vmatprep.subr.mxu0 0.0
    %88 = vmatpush1.msra.mxu0 %v62
    %89 = vmatprep.subr.mxu0 0.0
    %90 = vmatpush1.msra.mxu0 %v63
    %91 = vmatprep.subr.mxu0 0.0
    %92 = vmatpush1.msra.mxu0 %v64
    %93 = vmatprep.subr.mxu0 0.0
    %94 = vmatpush1.msra.mxu0 %v65
    %95 = vmatprep.subr.mxu0 0.0
    %96 = vmatpush1.msra.mxu0 %v66
    %97 = vmatprep.subr.mxu0 0.0
    %98 = vmatpush1.msra.mxu0 %v67
    %99 = vmatprep.subr.mxu0 0.0
    %100 = vmatpush1.msra.mxu0 %v68
    %101 = vmatprep.subr.mxu0 0.0
    %102 = vmatpush1.msra.mxu0 0.0
    %103 = vmatprep.subr.mxu0 0.0
    %104 = vmatpush1.msra.mxu0 0.0
    %105 = vmatprep.subr.mxu0 0.0
    %106 = vmatpush1.msra.mxu0 0.0
    %107 = vmatprep.subr.mxu0 0.0
    %108 = vmatpush1.msra.mxu0 0.0
    %109 = vmatprep.subr.mxu0 0.0
    %110 = vmatpush1.msra.mxu0 0.0
    %111 = vmatprep.subr.mxu0 0.0
    %112 = vmatpush1.msra.mxu0 0.0
    %113 = vmatprep.subr.mxu0 0.0
    %114 = vmatpush1.msra.mxu0 0.0
    %115 = vmatprep.subr.mxu0 0.0
    %116 = vmatpush1.msra.mxu0 0.0
    %117 = vmatprep.subr.mxu0 0.0
    %118 = vmatpush1.msra.mxu0 0.0
    %119 = vmatprep.subr.mxu0 0.0
    %120 = vmatpush1.msra.mxu0 0.0
    %121 = vmatprep.subr.mxu0 0.0
    %122 = vmatpush1.msra.mxu0 0.0
    %123 = vmatprep.subr.mxu0 0.0
    %124 = vmatpush1.msra.mxu0 0.0
    %125 = vmatprep.subr.mxu0 0.0
    %126 = vmatpush1.msra.mxu0 0.0
    %127 = vmatprep.subr.mxu0 0.0
    %128 = vmatpush1.msra.mxu0 0.0
    %129 = vmatprep.subr.mxu0 0.0
    %130 = vmatpush1.msra.mxu0 0.0
    %131 = vmatprep.subr.mxu0 0.0
    %132 = vmatpush1.msra.mxu0 0.0
    %133 = vmatprep.mubr.f32.mxu0 0.0
    %134 = vmatmul.mubr.f32.gmra.mrb[0].mxu0 %v52
    %v135 = vpop.f32.mrb[0].mxu0
    %v136 = vadd.f32 0.0, %v135
    %v137 = vpop.f32.mrb[0].mxu0
    %138 = vdwg.mxu0
    %v139 = vld [vmem:[#allocation5 + $0x8] ss:$0 sm:$0xff]
    %v140 = vld [vmem:[#allocation5 + $0x9] ss:$0 sm:$0xff]
    %v141 = vld [vmem:[#allocation5 + $0xa] ss:$0 sm:$0xff]
    %v142 = vld [vmem:[#allocation5 + $0xb] ss:$0 sm:$0xff]
    %v143 = vmul.f32 %v139, %v136
    %v144 = vmul.f32 %v140, %v136
    %v146 = vrot.slane %v144, 1
    %v148 = vsub.f32 %v143, %v146
    %v149 = vmul.f32 %v141, %v136
    %v151 = vrot.slane %v149, 2
    %v153 = vsub.f32 %v148, %v151
    %v154 = vmul.f32 %v142, %v136
    %v156 = vrot.slane %v154, 3
    %v158 = vsub.f32 %v153, %v156
    %v159 = vrot.slane %v144, 7
    %v161 = vadd.f32 %v143, %v159
    %v162 = vadd.f32 %v161, %v151
    %v163 = vrot.slane %v154, 1
    %v165 = vsub.f32 %v162, %v163
    %v166 = vrot.slane %v149, 6
    %v168 = vadd.f32 %v148, %v166
    %v169 = vrot.slane %v154, 7
    %v171 = vadd.f32 %v168, %v169
    %v172 = vsub.f32 %v161, %v166
    %v173 = vrot.slane %v154, 5
    %v175 = vadd.f32 %v172, %v173
    %vm176 = vcmask 1040384
    %v177 = vsel %vm176, %v158, %v165
    %vm178 = vcmask 1041408
    %v179 = vsel %vm178, %v177, %v171
    %vm180 = vcmask 1042432
    %v181 = vsel %vm180, %v179, %v175
    %vm182 = vcmask 1043456
    %v183 = vsel %vm182, %v181, 0.0
    %vm184 = vcmask 1044480
    %v185 = vsel %vm184, %v183, 0.0
    %vm186 = vcmask 1045504
    %v187 = vsel %vm186, %v185, 0.0
    %vm188 = vcmask 1046528
    %v189 = vsel %vm188, %v187, 0.0
    %190 = vst [vmem:[#allocation7 + $0x8] sm:$0xff] %v189
    %v191 = vld [vmem:[#allocation7 + $0x8] sm:$0xff]
    %v192 = vld [vmem:[#allocation2 + $0x10] sm:$0xff]
    %v193 = vld [vmem:[#allocation2 + $0x30] sm:$0xff]
    %v194 = vld [vmem:[#allocation2 + $0x50] sm:$0xff]
    %v195 = vld [vmem:[#allocation2 + $0x70] sm:$0xff]
    %v196 = vld [vmem:[#allocation2 + $0x90] sm:$0xff]
    %v197 = vld [vmem:[#allocation2 + $0xb0] sm:$0xff]
    %v198 = vld [vmem:[#allocation2 + $0xd0] sm:$0xff]
    %v199 = vld [vmem:[#allocation2 + $0xf0] sm:$0xff]
    %v200 = vld [vmem:[#allocation2 + $0x110] sm:$0xff]
    %v201 = vld [vmem:[#allocation2 + $0x130] sm:$0xff]
    %v202 = vld [vmem:[#allocation2 + $0x150] sm:$0xff]
    %v203 = vld [vmem:[#allocation2 + $0x170] sm:$0xff]
    %v204 = vld [vmem:[#allocation2 + $0x190] sm:$0xff]
    %v205 = vld [vmem:[#allocation2 + $0x1b0] sm:$0xff]
    %v206 = vld [vmem:[#allocation2 + $0x1d0] sm:$0xff]
    %v207 = vld [vmem:[#allocation2 + $0x1f0] sm:$0xff]
    %208 = vmatprep.subr.mxu0 0.0
    %209 = vmatpush1.msra.mxu0 %v192
    %210 = vmatprep.subr.mxu0 0.0
    %211 = vmatpush1.msra.mxu0 %v193
    %212 = vmatprep.subr.mxu0 0.0
    %213 = vmatpush1.msra.mxu0 %v194
    %214 = vmatprep.subr.mxu0 0.0
    %215 = vmatpush1.msra.mxu0 %v195
    %216 = vmatprep.subr.mxu0 0.0
    %217 = vmatpush1.msra.mxu0 %v196
    %218 = vmatprep.subr.mxu0 0.0
    %219 = vmatpush1.msra.mxu0 %v197
    %220 = vmatprep.subr.mxu0 0.0
    %221 = vmatpush1.msra.mxu0 %v198
    %222 = vmatprep.subr.mxu0 0.0
    %223 = vmatpush1.msra.mxu0 %v199
    %224 = vmatprep.subr.mxu0 0.0
    %225 = vmatpush1.msra.mxu0 %v200
    %226 = vmatprep.subr.mxu0 0.0
    %227 = vmatpush1.msra.mxu0 %v201
    %228 = vmatprep.subr.mxu0 0.0
    %229 = vmatpush1.msra.mxu0 %v202
    %230 = vmatprep.subr.mxu0 0.0
    %231 = vmatpush1.msra.mxu0 %v203
    %232 = vmatprep.subr.mxu0 0.0
    %233 = vmatpush1.msra.mxu0 %v204
    %234 = vmatprep.subr.mxu0 0.0
    %235 = vmatpush1.msra.mxu0 %v205
    %236 = vmatprep.subr.mxu0 0.0
    %237 = vmatpush1.msra.mxu0 %v206
    %238 = vmatprep.subr.mxu0 0.0
    %239 = vmatpush1.msra.mxu0 %v207
    %240 = vmatprep.subr.mxu0 0.0
    %241 = vmatpush1.msra.mxu0 0.0
    %242 = vmatprep.subr.mxu0 0.0
    %243 = vmatpush1.msra.mxu0 0.0
    %244 = vmatprep.subr.mxu0 0.0
    %245 = vmatpush1.msra.mxu0 0.0
    %246 = vmatprep.subr.mxu0 0.0
    %247 = vmatpush1.msra.mxu0 0.0
    %248 = vmatprep.subr.mxu0 0.0
    %249 = vmatpush1.msra.mxu0 0.0
    %250 = vmatprep.subr.mxu0 0.0
    %251 = vmatpush1.msra.mxu0 0.0
    %252 = vmatprep.subr.mxu0 0.0
    %253 = vmatpush1.msra.mxu0 0.0
    %254 = vmatprep.subr.mxu0 0.0
    %255 = vmatpush1.msra.mxu0 0.0
    %256 = vmatprep.subr.mxu0 0.0
    %257 = vmatpush1.msra.mxu0 0.0
    %258 = vmatprep.subr.mxu0 0.0
    %259 = vmatpush1.msra.mxu0 0.0
    %260 = vmatprep.subr.mxu0 0.0
    %261 = vmatpush1.msra.mxu0 0.0
    %262 = vmatprep.subr.mxu0 0.0
    %263 = vmatpush1.msra.mxu0 0.0
    %264 = vmatprep.subr.mxu0 0.0
    %265 = vmatpush1.msra.mxu0 0.0
    %266 = vmatprep.subr.mxu0 0.0
    %267 = vmatpush1.msra.mxu0 0.0
    %268 = vmatprep.subr.mxu0 0.0
    %269 = vmatpush1.msra.mxu0 0.0
    %270 = vmatprep.subr.mxu0 0.0
    %271 = vmatpush1.msra.mxu0 0.0
    %272 = vmatprep.mubr.f32.mxu0 0.0
    %273 = vmatmul.mubr.f32.gmra.mrb[0].mxu0 %v191
    %v274 = vpop.f32.mrb[0].mxu0
    %v275 = vadd.f32 0.0, %v274
    %v276 = vpop.f32.mrb[0].mxu0
    %277 = vdwg.mxu0
    %v278 = vld [vmem:[#allocation5 + $0x10] ss:$0 sm:$0xff]
    %v279 = vld [vmem:[#allocation5 + $0x11] ss:$0 sm:$0xff]
    %v280 = vld [vmem:[#allocation5 + $0x12] ss:$0 sm:$0xff]
    %v281 = vld [vmem:[#allocation5 + $0x13] ss:$0 sm:$0xff]
    %v282 = vmul.f32 %v278, %v275
    %v283 = vmul.f32 %v279, %v275
    %v285 = vrot.slane %v283, 1
    %v287 = vsub.f32 %v282, %v285
    %v288 = vmul.f32 %v280, %v275
    %v290 = vrot.slane %v288, 2
    %v292 = vsub.f32 %v287, %v290
    %v293 = vmul.f32 %v281, %v275
    %v295 = vrot.slane %v293, 3
    %v297 = vsub.f32 %v292, %v295
    %v298 = vrot.slane %v283, 7
    %v300 = vadd.f32 %v282, %v298
    %v301 = vadd.f32 %v300, %v290
    %v302 = vrot.slane %v293, 1
    %v304 = vsub.f32 %v301, %v302
    %v305 = vrot.slane %v288, 6
    %v307 = vadd.f32 %v287, %v305
    %v308 = vrot.slane %v293, 7
    %v310 = vadd.f32 %v307, %v308
    %v311 = vsub.f32 %v300, %v305
    %v312 = vrot.slane %v293, 5
    %v314 = vadd.f32 %v311, %v312
    %v315 = vsel %vm176, %v297, %v304
    %v316 = vsel %vm178, %v315, %v310
    %v317 = vsel %vm180, %v316, %v314
    %v318 = vsel %vm182, %v317, 0.0
    %v319 = vsel %vm184, %v318, 0.0
    %v320 = vsel %vm186, %v319, 0.0
    %v321 = vsel %vm188, %v320, 0.0
    %322 = vst [vmem:[#allocation7 + $0x10] sm:$0xff] %v321
    %v323 = vld [vmem:[#allocation7 + $0x10] sm:$0xff]
    %v324 = vld [vmem:[#allocation2 + $0x18] sm:$0xff]
    %v325 = vld [vmem:[#allocation2 + $0x38] sm:$0xff]
    %v326 = vld [vmem:[#allocation2 + $0x58] sm:$0xff]
    %v327 = vld [vmem:[#allocation2 + $0x78] sm:$0xff]
    %v328 = vld [vmem:[#allocation2 + $0x98] sm:$0xff]
    %v329 = vld [vmem:[#allocation2 + $0xb8] sm:$0xff]
    %v330 = vld [vmem:[#allocation2 + $0xd8] sm:$0xff]
    %v331 = vld [vmem:[#allocation2 + $0xf8] sm:$0xff]
    %v332 = vld [vmem:[#allocation2 + $0x118] sm:$0xff]
    %v333 = vld [vmem:[#allocation2 + $0x138] sm:$0xff]
    %v334 = vld [vmem:[#allocation2 + $0x158] sm:$0xff]
    %v335 = vld [vmem:[#allocation2 + $0x178] sm:$0xff]
    %v336 = vld [vmem:[#allocation2 + $0x198] sm:$0xff]
    %v337 = vld [vmem:[#allocation2 + $0x1b8] sm:$0xff]
    %v338 = vld [vmem:[#allocation2 + $0x1d8] sm:$0xff]
    %v339 = vld [vmem:[#allocation2 + $0x1f8] sm:$0xff]
    %340 = vmatprep.subr.mxu0 0.0
    %341 = vmatpush1.msra.mxu0 %v324
    %342 = vmatprep.subr.mxu0 0.0
    %343 = vmatpush1.msra.mxu0 %v325
    %344 = vmatprep.subr.mxu0 0.0
    %345 = vmatpush1.msra.mxu0 %v326
    %346 = vmatprep.subr.mxu0 0.0
    %347 = vmatpush1.msra.mxu0 %v327
    %348 = vmatprep.subr.mxu0 0.0
    %349 = vmatpush1.msra.mxu0 %v328
    %350 = vmatprep.subr.mxu0 0.0
    %351 = vmatpush1.msra.mxu0 %v329
    %352 = vmatprep.subr.mxu0 0.0
    %353 = vmatpush1.msra.mxu0 %v330
    %354 = vmatprep.subr.mxu0 0.0
    %355 = vmatpush1.msra.mxu0 %v331
    %356 = vmatprep.subr.mxu0 0.0
    %357 = vmatpush1.msra.mxu0 %v332
    %358 = vmatprep.subr.mxu0 0.0
    %359 = vmatpush1.msra.mxu0 %v333
    %360 = vmatprep.subr.mxu0 0.0
    %361 = vmatpush1.msra.mxu0 %v334
    %362 = vmatprep.subr.mxu0 0.0
    %363 = vmatpush1.msra.mxu0 %v335
    %364 = vmatprep.subr.mxu0 0.0
    %365 = vmatpush1.msra.mxu0 %v336
    %366 = vmatprep.subr.mxu0 0.0
    %367 = vmatpush1.msra.mxu0 %v337
    %368 = vmatprep.subr.mxu0 0.0
    %369 = vmatpush1.msra.mxu0 %v338
    %370 = vmatprep.subr.mxu0 0.0
    %371 = vmatpush1.msra.mxu0 %v339
    %372 = vmatprep.subr.mxu0 0.0
    %373 = vmatpush1.msra.mxu0 0.0
    %374 = vmatprep.subr.mxu0 0.0
    %375 = vmatpush1.msra.mxu0 0.0
    %376 = vmatprep.subr.mxu0 0.0
    %377 = vmatpush1.msra.mxu0 0.0
    %378 = vmatprep.subr.mxu0 0.0
    %379 = vmatpush1.msra.mxu0 0.0
    %380 = vmatprep.subr.mxu0 0.0
    %381 = vmatpush1.msra.mxu0 0.0
    %382 = vmatprep.subr.mxu0 0.0
    %383 = vmatpush1.msra.mxu0 0.0
    %384 = vmatprep.subr.mxu0 0.0
    %385 = vmatpush1.msra.mxu0 0.0
    %386 = vmatprep.subr.mxu0 0.0
    %387 = vmatpush1.msra.mxu0 0.0
    %388 = vmatprep.subr.mxu0 0.0
    %389 = vmatpush1.msra.mxu0 0.0
    %390 = vmatprep.subr.mxu0 0.0
    %391 = vmatpush1.msra.mxu0 0.0
    %392 = vmatprep.subr.mxu0 0.0
    %393 = vmatpush1.msra.mxu0 0.0
    %394 = vmatprep.subr.mxu0 0.0
    %395 = vmatpush1.msra.mxu0 0.0
    %396 = vmatprep.subr.mxu0 0.0
    %397 = vmatpush1.msra.mxu0 0.0
    %398 = vmatprep.subr.mxu0 0.0
    %399 = vmatpush1.msra.mxu0 0.0
    %400 = vmatprep.subr.mxu0 0.0
    %401 = vmatpush1.msra.mxu0 0.0
    %402 = vmatprep.subr.mxu0 0.0
    %403 = vmatpush1.msra.mxu0 0.0
    %404 = vmatprep.mubr.f32.mxu0 0.0
    %405 = vmatmul.mubr.f32.gmra.mrb[0].mxu0 %v323
    %v406 = vpop.f32.mrb[0].mxu0
    %v407 = vadd.f32 0.0, %v406
    %v408 = vpop.f32.mrb[0].mxu0
    %409 = vdwg.mxu0
    %v410 = vld [vmem:[#allocation5 + $0x18] ss:$0 sm:$0xff]
    %v411 = vld [vmem:[#allocation5 + $0x19] ss:$0 sm:$0xff]
    %v412 = vld [vmem:[#allocation5 + $0x1a] ss:$0 sm:$0xff]
    %v413 = vld [vmem:[#allocation5 + $0x1b] ss:$0 sm:$0xff]
    %v414 = vmul.f32 %v410, %v407
    %v415 = vmul.f32 %v411, %v407
    %v417 = vrot.slane %v415, 1
    %v419 = vsub.f32 %v414, %v417
    %v420 = vmul.f32 %v412, %v407
    %v422 = vrot.slane %v420, 2
    %v424 = vsub.f32 %v419, %v422
    %v425 = vmul.f32 %v413, %v407
    %v427 = vrot.slane %v425, 3
    %v429 = vsub.f32 %v424, %v427
    %v430 = vrot.slane %v415, 7
    %v432 = vadd.f32 %v414, %v430
    %v433 = vadd.f32 %v432, %v422
    %v434 = vrot.slane %v425, 1
    %v436 = vsub.f32 %v433, %v434
    %v437 = vrot.slane %v420, 6
    %v439 = vadd.f32 %v419, %v437
    %v440 = vrot.slane %v425, 7
    %v442 = vadd.f32 %v439, %v440
    %v443 = vsub.f32 %v432, %v437
    %v444 = vrot.slane %v425, 5
    %v446 = vadd.f32 %v443, %v444
    %v447 = vsel %vm176, %v429, %v436
    %v448 = vsel %vm178, %v447, %v442
    %v449 = vsel %vm180, %v448, %v446
    %v450 = vsel %vm182, %v449, 0.0
    %v451 = vsel %vm184, %v450, 0.0
    %v452 = vsel %vm186, %v451, 0.0
    %v453 = vsel %vm188, %v452, 0.0
    %454 = vst [vmem:[#allocation7 + $0x18] sm:$0xff] %v453
    // Predicated region
    $region18: #{tpu_custom_call.1} parent=1 // pred_check
      _
    $region19: #{tpu_custom_call.1} parent=1 // pred_check_branch
      %456 = sbr.rel (0) target = $region21
    $region20: #{tpu_custom_call.1} parent=1 // pred_region
      %s458 = ssub.s32 512, 512
      %459 = vsyncadd [#allocation4], %s458
      %s461 = sshll.u32 [#allocation7], 4
      %s462 = int_to_ptr.vmem [resolvable:$true] %s461
      %464 = dma.vmem_to_hbm [thread:$0]  %s462, 512, %s2, [#allocation4]
    $region21: #{tpu_custom_call.1} parent=1 // pred_fallthru
      _
    // Predicated region
    $region22: #{tpu_custom_call.1} parent=1 // pred_check
      _
    $region23: #{tpu_custom_call.1} parent=1 // pred_check_branch
      %466 = sbr.rel (0) target = $region25
    $region24: #{tpu_custom_call.1} parent=1 // pred_region
      %467 = dma.done [#allocation4], 512
    $region25: #{tpu_custom_call.1} parent=1 // pred_fallthru
      _
    %468 = vsyncpa [#allocation3], 1
    %469 = vsyncpa [#allocation6], 1
    %470 = vsyncpa [#allocation4], 1

</llo_original>
